<compile_context>
chip_gen: v7x
topology: tpu7x:2x2x1
jax: 0.10.0
libtpu: 0.0.40
codegen_flags: <defaults>
</compile_context>

<pallas_src>
import functools
import math

import jax
import jax.numpy as jnp
from jax.experimental import pallas as pl
from jax.experimental.pallas import tpu as pltpu


def reparam_kernel(x_ref, w_ref, b_ref, out_ref):
    # Single fused GEMM + bias add:  [TB, kC] @ [kC, kN] + [1, kN]
    out_ref[...] = (
        jnp.dot(x_ref[...], w_ref[...], preferred_element_type=jnp.float32)
        + b_ref[...]
    ).astype(out_ref.dtype)


def _cdiv(a, b):
    return -(-a // b)


def _round_up(v, m):
    return _cdiv(v, m) * m


def _lane_pack_factor(c_in, n_out, lanes=128):
    """Smallest k such that k*c_in and k*n_out are multiples of 128 lanes."""
    k1 = lanes // math.gcd(c_in, lanes)
    k2 = lanes // math.gcd(n_out, lanes)
    k = k1 * k2 // math.gcd(k1, k2)
    # Bail out of packing if the kron'd weight would get unreasonably large.
    if k * c_in > 2048 or k * n_out > 2048:
        return 1
    return k


def _choose_row_tile(n_rows, row_bytes, k):
    """Packed-row tile: big enough to amortize per-step overhead, VMEM-safe,
    and split so v7x's two TensorCores both get work for large batches."""
    row_cap = max(8, (16384 // k // 8) * 8)            # ~16K original rows/step
    budget_cap = (16 * 1024 * 1024) // max(1, 2 * row_bytes)  # 16 MiB dbl-buffered
    tb = max(8, (min(row_cap, budget_cap) // 8) * 8)
    # v7x megacore: ensure >=2 grid steps when there is enough work to split.
    if n_rows <= tb and n_rows >= 256:
        tb = max(8, _round_up(_cdiv(n_rows, 2), 8))
    if n_rows <= tb:
        tb = n_rows                                    # single full-extent block
    return tb


def reparam_block(x, w_mu, b_mu, w_std, b_std, *, compute_dtype=jnp.float32):
    """x: [B, C_in], w_*: [C_in, latent], b_*: [latent] -> (mu, logvar)."""
    B, C_in = x.shape
    latent = w_mu.shape[1]
    n_out = 2 * latent

    # Fuse the two heads into one GEMM.
    w_cat = jnp.concatenate([w_mu, w_std], axis=1)                 # [C_in, 2L]
    b_cat = jnp.concatenate([b_mu, b_std], axis=0).reshape(1, n_out)

    # ---- Lane-dense packing -------------------------------------------------
    k = _lane_pack_factor(C_in, n_out)
    Bp = _round_up(B, k)
    if Bp != B:
        # Only a <= (k-1)-row pad when B is not a multiple of k; the old
        # pad-to-full-tile HBM round trip is gone.
        x = jnp.pad(x, ((0, Bp - B), (0, 0)))
    n_rows = Bp // k
    kC, kN = k * C_in, k * n_out

    x_pk = x.reshape(n_rows, kC)                                   # view, no copy
    if k > 1:
        w_pk = jnp.kron(jnp.eye(k, dtype=w_cat.dtype), w_cat)      # [kC, kN]
        b_pk = jnp.tile(b_cat, (1, k))                             # [1, kN]
    else:
        w_pk, b_pk = w_cat, b_cat

    # bf16 inputs halve the dominant HBM read traffic on v6e/v7x; accumulate
    # stays f32 on the MXU and the bias add / output stay f32 on the VPU.
    x_pk = x_pk.astype(compute_dtype)
    w_pk = w_pk.astype(compute_dtype)
    b_pk = b_pk.astype(jnp.float32)
    in_itemsize = jnp.dtype(compute_dtype).itemsize

    # ---- Batch-row tiling & grid -------------------------------------------
    row_bytes = kC * in_itemsize + kN * 4           # one x row (in) + one out row
    tb = _choose_row_tile(n_rows, row_bytes, k)
    grid = (_cdiv(n_rows, tb),)                     # last block may be partial;
                                                    # its rows are sliced off below.

    # Tight scoped-VMEM reservation: double-buffered x/out tiles + (tiny)
    # double-buffered weights/bias + ~2 MiB headroom.  Safe on v7x's 64 MiB.
    needed = (2 * tb * kC * in_itemsize
              + 2 * tb * kN * 4
              + 2 * (kC * kN * in_itemsize + kN * 4)
              + 2 * 1024 * 1024)
    vmem_limit = int(min(max(needed, 4 * 1024 * 1024), 64 * 1024 * 1024))

    cost = pl.CostEstimate(
        flops=2 * n_rows * kC * kN,
        transcendentals=0,
        bytes_accessed=(n_rows * kC * in_itemsize + kC * kN * in_itemsize
                        + kN * 4 + n_rows * kN * 4),
    )

    out_pk = pl.pallas_call(
        reparam_kernel,
        out_shape=jax.ShapeDtypeStruct((n_rows, kN), jnp.float32),
        grid_spec=pltpu.PrefetchScalarGridSpec(
            num_scalar_prefetch=0,
            grid=grid,
            in_specs=[
                pl.BlockSpec((tb, kC), lambda i: (i, 0)),   # streamed x tile
                pl.BlockSpec((kC, kN), lambda i: (0, 0)),   # resident weights
                pl.BlockSpec((1, kN), lambda i: (0, 0)),    # resident bias
            ],
            out_specs=pl.BlockSpec((tb, kN), lambda i: (i, 0)),
        ),
        compiler_params=pltpu.CompilerParams(
            dimension_semantics=("parallel",),
            vmem_limit_bytes=vmem_limit,
        ),
        cost_estimate=cost,
    )(x_pk, w_pk, b_pk)

    # Un-pack lanes back to per-row outputs; drop any padded rows (keep this
    # slice: boundary-block rows are uninitialized by construction).
    out = out_pk.reshape(Bp, n_out)[:B]
    mu = out[:, :latent]
    logvar = out[:, latent:]
    return mu, logvar


if __name__ == "__main__":
    # Small deterministic example consistent with nn.Linear(in_channel, latent_size).
    in_channel, latent_size = 32, 16

    key = jax.random.PRNGKey(0)
    kx, kwm, kbm, kws, kbs = jax.random.split(key, 5)

    # PyTorch default Linear init: U(-1/sqrt(fan_in), 1/sqrt(fan_in)).
    bound = 1.0 / (in_channel ** 0.5)
    w_mu = jax.random.uniform(kwm, (in_channel, latent_size),
                              minval=-bound, maxval=bound, dtype=jnp.float32)
    b_mu = jax.random.uniform(kbm, (latent_size,),
                              minval=-bound, maxval=bound, dtype=jnp.float32)
    w_std = jax.random.uniform(kws, (in_channel, latent_size),
                               minval=-bound, maxval=bound, dtype=jnp.float32)
    b_std = jax.random.uniform(kbs, (latent_size,),
                               minval=-bound, maxval=bound, dtype=jnp.float32)

    run_f32 = jax.jit(functools.partial(reparam_block, compute_dtype=jnp.float32))
    run_bf16 = jax.jit(functools.partial(reparam_block, compute_dtype=jnp.bfloat16))

    ok = True
    # B=8: aligned; B=10: exercises the pad-to-multiple-of-k path;
    # B=1024: exercises a multi-step (>=2) grid.
    for B in (8, 10, 1024):
        x = jax.random.normal(jax.random.fold_in(kx, B), (B, in_channel),
                              dtype=jnp.float32)
        mu, logvar = run_f32(x, w_mu, b_mu, w_std, b_std)
        jax.block_until_ready((mu, logvar))

        mu_ref = x @ w_mu + b_mu
        logvar_ref = x @ w_std + b_std
        ok &= bool(jnp.allclose(mu, mu_ref, atol=1e-5))
        ok &= bool(jnp.allclose(logvar, logvar_ref, atol=1e-5))

    # bf16 fast path (halves HBM read traffic on v6e/v7x); looser tolerance.
    xb = jax.random.normal(jax.random.fold_in(kx, 7), (1024, in_channel),
                           dtype=jnp.float32)
    mu_b, logvar_b = run_bf16(xb, w_mu, b_mu, w_std, b_std)
    jax.block_until_ready((mu_b, logvar_b))
    ok &= bool(jnp.allclose(mu_b, xb @ w_mu + b_mu, atol=5e-2, rtol=5e-2))
    ok &= bool(jnp.allclose(logvar_b, xb @ w_std + b_std, atol=5e-2, rtol=5e-2))

    assert ok, "mu/logvar mismatch vs. pure-JAX reference"
    print("KERNEL_OK")
</pallas_src>

<mosaic_0001>
module attributes {stable_mosaic.version = 11 : i64} {
  func.func @reparam_kernel(%arg0: i32, %arg1: memref<2x128xf32, #tpu.memory_space<vmem>>, %arg2: memref<128x128xf32, #tpu.memory_space<vmem>>, %arg3: memref<1x128xf32, #tpu.memory_space<vmem>>, %arg4: memref<2x128xf32, #tpu.memory_space<vmem>>) attributes {dimension_semantics = [#tpu.dimension_semantics<parallel>], iteration_bounds = array<i64: 1>, scalar_prefetch = 0 : i64, scratch_operands = 0 : i64, tpu.core_type = #tpu.core_type<tc>, window_params = [{transform_indices = @transform_0, window_bounds = array<i64: 2, 128>}, {pipeline_mode = #tpu.pipeline_mode<synchronous>, transform_indices = @transform_1, window_bounds = array<i64: 128, 128>}, {pipeline_mode = #tpu.pipeline_mode<synchronous>, transform_indices = @transform_2, window_bounds = array<i64: 1, 128>}, {transform_indices = @transform_3, window_bounds = array<i64: 2, 128>}]} {
    %c0 = arith.constant 0 : index
    %c0_0 = arith.constant 0 : index
    %0 = vector.load %arg1[%c0, %c0_0] : memref<2x128xf32, #tpu.memory_space<vmem>>, vector<2x128xf32>
    %c0_1 = arith.constant 0 : index
    %c0_2 = arith.constant 0 : index
    %1 = vector.load %arg2[%c0_1, %c0_2] : memref<128x128xf32, #tpu.memory_space<vmem>>, vector<128x128xf32>
    %cst = arith.constant dense<0.000000e+00> : vector<2x128xf32>
    %2 = tpu.matmul %0, %1, %cst {dimension_numbers = #tpu.dot_dimension_numbers<[1], [0], [0], [1], [0, 0, 1, 1], [], []>} : vector<2x128xf32>, vector<128x128xf32>, vector<2x128xf32> -> vector<2x128xf32>
    %c0_3 = arith.constant 0 : index
    %c0_4 = arith.constant 0 : index
    %3 = vector.load %arg3[%c0_3, %c0_4] : memref<1x128xf32, #tpu.memory_space<vmem>>, vector<1x128xf32>
    %4 = vector.broadcast %3 : vector<1x128xf32> to vector<2x128xf32>
    %5 = arith.addf %2, %4 : vector<2x128xf32>
    %c0_5 = arith.constant 0 : index
    %c0_6 = arith.constant 0 : index
    %6 = vector.load %arg4[%c0_5, %c0_6] : memref<2x128xf32, #tpu.memory_space<vmem>>, vector<2x128xf32>
    tpu.vector_store %arg4[%c0_5, %c0_6], %5 {strides = array<i32>} : memref<2x128xf32, #tpu.memory_space<vmem>>, vector<2x128xf32>,
    return
  }
  func.func @transform_0(%arg0: i32) -> (i32, i32) {
    %c0_i32 = arith.constant 0 : i32
    %c0_i32_0 = arith.constant 0 : i32
    return %arg0, %c0_i32 : i32, i32
  }
  func.func @transform_1(%arg0: i32) -> (i32, i32) {
    %c0_i32 = arith.constant 0 : i32
    %c0_i32_0 = arith.constant 0 : i32
    %c0_i32_1 = arith.constant 0 : i32
    return %c0_i32, %c0_i32_0 : i32, i32
  }
  func.func @transform_2(%arg0: i32) -> (i32, i32) {
    %c0_i32 = arith.constant 0 : i32
    %c0_i32_0 = arith.constant 0 : i32
    %c0_i32_1 = arith.constant 0 : i32
    return %c0_i32, %c0_i32_0 : i32, i32
  }
  func.func @transform_3(%arg0: i32) -> (i32, i32) {
    %c0_i32 = arith.constant 0 : i32
    %c0_i32_0 = arith.constant 0 : i32
    return %arg0, %c0_i32 : i32, i32
  }
}

</mosaic_0001>

<llo_original>
// kernel: reparam_block.1
$region0: #{reparam_block.1}
  #allocation0 [shape = 'u32[]', space=smem, size = 0x4, offset = 0x4, fixed_abs, tag = 'smem constant byte address 0x4 - core index']
  #allocation1 [shape = 'u32[144,128]{1,0:T(1,128)}', space=vmem, size = 0x12000, scoped, tag = 'internal scratch']
  %s0 = inlined_call_operand.vmem [shape: f32[2,128], index: 0, kind: input, shape index: {}]
  %s1 = inlined_call_operand.vmem [shape: f32[128,128], index: 1, kind: input, shape index: {}]
  %s2 = inlined_call_operand.vmem [shape: f32[1,128], index: 2, kind: input, shape index: {}]
  %s3 = inlined_call_operand.vmem [shape: f32[2,128], index: 3, kind: output, shape index: {}]
  %s4 = sld [smem:[#allocation0]]
  $region22: #{reparam_block.1} parent=0
    _
  %s6 = ssub.s32 1, %s4
  %s7 = scalar_select 0, %s6, %s4
  // Predicated region
  $region2: #{reparam_block.1} parent=0 // pred_check
    _
  $region3: #{reparam_block.1} parent=0 // pred_check_branch
    %9 = sbr.rel (0) target = $region5
  $region4: #{reparam_block.1} parent=0 // pred_region
    _
  $region5: #{reparam_block.1} parent=0 // pred_fallthru
    _
  // Predicated region
  $region6: #{reparam_block.1} parent=0 // pred_check
    _
  $region7: #{reparam_block.1} parent=0 // pred_check_branch
    %11 = sbr.rel (0) target = $region9
  $region8: #{reparam_block.1} parent=0 // pred_region
    _
  $region9: #{reparam_block.1} parent=0 // pred_fallthru
    _
  // Predicated region
  $region10: #{reparam_block.1} parent=0 // pred_check
    _
  $region11: #{reparam_block.1} parent=0 // pred_check_branch
    %13 = sbr.rel (0) target = $region13
  $region12: #{reparam_block.1} parent=0 // pred_region
    _
  $region13: #{reparam_block.1} parent=0 // pred_fallthru
    _
  %v14 = vld [vmem:[%s0] sm:$0x3]
  %v15 = vld [vmem:[%s1] sm:$0xff]
  %v16 = vld [vmem:[%s1 + $0x8] sm:$0xff]
  %v17 = vld [vmem:[%s1 + $0x10] sm:$0xff]
  %v18 = vld [vmem:[%s1 + $0x18] sm:$0xff]
  %v19 = vld [vmem:[%s1 + $0x20] sm:$0xff]
  %v20 = vld [vmem:[%s1 + $0x28] sm:$0xff]
  %v21 = vld [vmem:[%s1 + $0x30] sm:$0xff]
  %v22 = vld [vmem:[%s1 + $0x38] sm:$0xff]
  %v23 = vld [vmem:[%s1 + $0x40] sm:$0xff]
  %v24 = vld [vmem:[%s1 + $0x48] sm:$0xff]
  %v25 = vld [vmem:[%s1 + $0x50] sm:$0xff]
  %v26 = vld [vmem:[%s1 + $0x58] sm:$0xff]
  %v27 = vld [vmem:[%s1 + $0x60] sm:$0xff]
  %v28 = vld [vmem:[%s1 + $0x68] sm:$0xff]
  %v29 = vld [vmem:[%s1 + $0x70] sm:$0xff]
  %v30 = vld [vmem:[%s1 + $0x78] sm:$0xff]
  %v31 = vld [vmem:[%s2] sm:$0x1]
  %v33 = vlaneseq
  %v34 = vshrl.u32 %v33, 7
  %v35 = vsub.s32 0, %v34
  %v36 = vrot.slane %v31, %v35
  %38 = vmatprep.subr.mxu0 0.0
  %39 = vmatpush1.msra.mxu0 %v15
  %40 = vmatprep.subr.mxu0 0.0
  %41 = vmatpush1.msra.mxu0 %v16
  %42 = vmatprep.subr.mxu0 0.0
  %43 = vmatpush1.msra.mxu0 %v17
  %44 = vmatprep.subr.mxu0 0.0
  %45 = vmatpush1.msra.mxu0 %v18
  %46 = vmatprep.subr.mxu0 0.0
  %47 = vmatpush1.msra.mxu0 %v19
  %48 = vmatprep.subr.mxu0 0.0
  %49 = vmatpush1.msra.mxu0 %v20
  %50 = vmatprep.subr.mxu0 0.0
  %51 = vmatpush1.msra.mxu0 %v21
  %52 = vmatprep.subr.mxu0 0.0
  %53 = vmatpush1.msra.mxu0 %v22
  %54 = vmatprep.subr.mxu0 0.0
  %55 = vmatpush1.msra.mxu0 %v23
  %56 = vmatprep.subr.mxu0 0.0
  %57 = vmatpush1.msra.mxu0 %v24
  %58 = vmatprep.subr.mxu0 0.0
  %59 = vmatpush1.msra.mxu0 %v25
  %60 = vmatprep.subr.mxu0 0.0
  %61 = vmatpush1.msra.mxu0 %v26
  %62 = vmatprep.subr.mxu0 0.0
  %63 = vmatpush1.msra.mxu0 %v27
  %64 = vmatprep.subr.mxu0 0.0
  %65 = vmatpush1.msra.mxu0 %v28
  %66 = vmatprep.subr.mxu0 0.0
  %67 = vmatpush1.msra.mxu0 %v29
  %68 = vmatprep.subr.mxu0 0.0
  %69 = vmatpush1.msra.mxu0 %v30
  %70 = vmatprep.subr.mxu0 0.0
  %71 = vmatpush1.msra.mxu0 0.0
  %72 = vmatprep.subr.mxu0 0.0
  %73 = vmatpush1.msra.mxu0 0.0
  %74 = vmatprep.subr.mxu0 0.0
  %75 = vmatpush1.msra.mxu0 0.0
  %76 = vmatprep.subr.mxu0 0.0
  %77 = vmatpush1.msra.mxu0 0.0
  %78 = vmatprep.subr.mxu0 0.0
  %79 = vmatpush1.msra.mxu0 0.0
  %80 = vmatprep.subr.mxu0 0.0
  %81 = vmatpush1.msra.mxu0 0.0
  %82 = vmatprep.subr.mxu0 0.0
  %83 = vmatpush1.msra.mxu0 0.0
  %84 = vmatprep.subr.mxu0 0.0
  %85 = vmatpush1.msra.mxu0 0.0
  %86 = vmatprep.subr.mxu0 0.0
  %87 = vmatpush1.msra.mxu0 0.0
  %88 = vmatprep.subr.mxu0 0.0
  %89 = vmatpush1.msra.mxu0 0.0
  %90 = vmatprep.subr.mxu0 0.0
  %91 = vmatpush1.msra.mxu0 0.0
  %92 = vmatprep.subr.mxu0 0.0
  %93 = vmatpush1.msra.mxu0 0.0
  %94 = vmatprep.subr.mxu0 0.0
  %95 = vmatpush1.msra.mxu0 0.0
  %96 = vmatprep.subr.mxu0 0.0
  %97 = vmatpush1.msra.mxu0 0.0
  %98 = vmatprep.subr.mxu0 0.0
  %99 = vmatpush1.msra.mxu0 0.0
  %100 = vmatprep.subr.mxu0 0.0
  %101 = vmatpush1.msra.mxu0 0.0
  %102 = vmatprep.mubr.f32.mxu0 0.0
  %103 = vmatmul.mubr.f32.gmra.mrb[0].mxu0 %v14
  %v104 = vpop.f32.mrb[0].mxu0
  %v105 = vadd.f32 %v36, %v104
  %v106 = vpop.f32.mrb[0].mxu0
  %107 = vdwg.mxu0
  %108 = vst [vmem:[%s3] sm:$0x3] %v105
  // Predicated region
  $region14: #{reparam_block.1} parent=0 // pred_check
    _
  $region15: #{reparam_block.1} parent=0 // pred_check_branch
    %110 = sbr.rel (0) target = $region17
  $region16: #{reparam_block.1} parent=0 // pred_region
    _
  $region17: #{reparam_block.1} parent=0 // pred_fallthru
    _
  // Predicated region
  $region18: #{reparam_block.1} parent=0 // pred_check
    _
  $region19: #{reparam_block.1} parent=0 // pred_check_branch
    %112 = sbr.rel (0) target = $region21
  $region20: #{reparam_block.1} parent=0 // pred_region
    _
  $region21: #{reparam_block.1} parent=0 // pred_fallthru
    _

</llo_original>
